<compile_context>
chip_gen: v7x
topology: tpu7x:2x2x1
jax: 0.10.0
libtpu: 0.0.40
codegen_flags: <defaults>
</compile_context>

<pallas_src>
import functools
import numpy as np
import jax
import jax.numpy as jnp
from jax.experimental import pallas as pl
from jax.experimental.pallas import tpu as pltpu


def _round_up(x, m):
    return ((x + m - 1) // m) * m


def _cdiv(a, b):
    return (a + b - 1) // b


# ----------------------------------------------------------------------------
# Fused Pallas kernel
# ----------------------------------------------------------------------------
def _fused_loss_kernel(ce_diff_ref, ce_w_ref, plog_ref, plab_ref, piou_ref,
                       out_ref, *, num_points, num_valid_rows, tile_rows):
    """One grid cell = (layer l, mask-row-tile n).

    ce_diff_ref / ce_w_ref : (1, R_ce, 128)  lane-dense over B*Q
        diff = z_{other} - z_{target}  (softmax-CE of 2 classes == softplus(diff))
        w    = class weight (1.0 object / 0.4 no-object), 0 on padded entries.
    plog_ref / plab_ref    : (1, TN, P_pad)  point logits / labels (row tile)
    piou_ref               : (1, TN, 1)      predicted iou per mask row
    out_ref                : (1, 8, 128)     accumulator, resident across n.
        lanes: 0 ce_num | 1 ce_den | 2 mask_ce_sum | 3 dice_sum | 4 l1_sum | 5 l1_cnt
    """
    n = pl.program_id(1)
    lane3 = jax.lax.broadcasted_iota(jnp.int32, out_ref.shape, 2)     # (1, 8, 128)

    # ---- init + classification CE (once per layer, at the first row tile) ----
    @pl.when(n == 0)
    def _():
        d = ce_diff_ref[0].astype(jnp.float32)                        # (R_ce, 128)
        w = ce_w_ref[0].astype(jnp.float32)
        # stable softplus; no one-hot, no cross-lane lse over a 2-wide axis.
        nll = jnp.maximum(d, 0.0) + jnp.log(1.0 + jnp.exp(-jnp.abs(d)))
        ce_num = jnp.sum(jnp.sum(w * nll, axis=-1, keepdims=True), axis=0, keepdims=True)
        ce_den = jnp.sum(jnp.sum(w, axis=-1, keepdims=True), axis=0, keepdims=True)
        out_ref[...] = (ce_num * (lane3 == 0).astype(jnp.float32)
                        + ce_den * (lane3 == 1).astype(jnp.float32))

    # ---- point-sampled mask losses: partial sums for this row tile ----
    x = plog_ref[0].astype(jnp.float32)                               # (TN, P_pad)
    t = plab_ref[0].astype(jnp.float32)
    tn, p_pad = x.shape

    lane = jax.lax.broadcasted_iota(jnp.int32, (tn, p_pad), 1)
    lmask = (lane < num_points).astype(jnp.float32)                   # valid point lanes
    row_ids = n * tile_rows + jax.lax.broadcasted_iota(jnp.int32, (tn, 1), 0)
    rmask = (row_ids < num_valid_rows).astype(jnp.float32)            # valid mask rows

    # shared transcendental: e = exp(-|x|) feeds both BCE and the sigmoid.
    e = jnp.exp(-jnp.abs(x))
    log1pe = jnp.log(1.0 + e)

    # sigmoid_ce_loss: BCE-with-logits, mean over true points, summed over rows.
    bce = (jnp.maximum(x, 0.0) - x * t + log1pe) * lmask
    ce_row = jnp.sum(bce, axis=-1, keepdims=True) * (1.0 / num_points)
    mask_ce = jnp.sum(ce_row * rmask, axis=0, keepdims=True)          # (1, 1)

    # dice_loss.
    inv1pe = pl.reciprocal(1.0 + e, approx=True)
    s = jnp.where(x >= 0.0, inv1pe, e * inv1pe) * lmask               # sigmoid(x), masked
    tm = t * lmask
    st_sum = jnp.sum(s * tm, axis=-1, keepdims=True)
    s_sum = jnp.sum(s, axis=-1, keepdims=True)
    t_sum = jnp.sum(tm, axis=-1, keepdims=True)
    dice_row = 1.0 - (2.0 * st_sum + 1.0) * pl.reciprocal(s_sum + t_sum + 1.0, approx=True)
    dice = jnp.sum(dice_row * rmask, axis=0, keepdims=True)           # (1, 1)

    # mask_iou on binarized sigmoid + l1_loss(pred_iou, gt_iou) partial sums.
    b = (s > 0.5).astype(jnp.float32)
    inter = jnp.sum(b * tm, axis=-1, keepdims=True)
    union = jnp.sum(b, axis=-1, keepdims=True) + t_sum - inter
    gt_iou = jnp.where(union > 0.0, inter * pl.reciprocal(union, approx=True), 0.0)
    pos = (gt_iou > 0.0).astype(jnp.float32) * rmask
    cnt = jnp.sum(pos, axis=0, keepdims=True)                         # (1, 1)
    src = piou_ref[0].astype(jnp.float32)                             # (TN, 1)
    l1_sum = jnp.sum(jnp.abs(src - gt_iou) * pos, axis=0, keepdims=True)

    out_ref[...] += (mask_ce * (lane3 == 2).astype(jnp.float32)
                     + dice * (lane3 == 3).astype(jnp.float32)
                     + l1_sum * (lane3 == 4).astype(jnp.float32)
                     + cnt * (lane3 == 5).astype(jnp.float32))


def fused_criterion_losses(ce_diff, ce_w, plog, plab, piou, *,
                           num_points, num_valid_rows, tile_rows):
    """Single gridded pallas_call over (layers, mask row tiles).

    ce_diff, ce_w : (L, R_ce, 128) f32
    plog, plab    : (L, N_pad, P_pad) f32  (N_pad multiple of tile_rows, P_pad of 128)
    piou          : (L, N_pad, 1) f32
    returns       : (L, 8, 128) f32 packed per-layer partial sums (sublane-replicated)
    """
    L, R_ce, _ = ce_diff.shape
    _, N_pad, P_pad = plog.shape
    n_tiles = N_pad // tile_rows

    kernel = functools.partial(_fused_loss_kernel, num_points=num_points,
                               num_valid_rows=num_valid_rows, tile_rows=tile_rows)
    return pl.pallas_call(
        kernel,
        out_shape=jax.ShapeDtypeStruct((L, 8, 128), jnp.float32),
        grid_spec=pltpu.PrefetchScalarGridSpec(
            num_scalar_prefetch=0,
            grid=(L, n_tiles),
            in_specs=[
                pl.BlockSpec((1, R_ce, 128), lambda l, n: (l, 0, 0)),
                pl.BlockSpec((1, R_ce, 128), lambda l, n: (l, 0, 0)),
                pl.BlockSpec((1, tile_rows, P_pad), lambda l, n: (l, n, 0)),
                pl.BlockSpec((1, tile_rows, P_pad), lambda l, n: (l, n, 0)),
                pl.BlockSpec((1, tile_rows, 1), lambda l, n: (l, n, 0)),
            ],
            out_specs=pl.BlockSpec((1, 8, 128), lambda l, n: (l, 0, 0)),
        ),
        compiler_params=pltpu.CompilerParams(
            # layers are independent (megacore on v7x); row-tile axis accumulates.
            dimension_semantics=("parallel", "arbitrary"),
            # tile_rows <= 128 keeps 2 inputs x 2 buffers well inside v7x's 64 MiB
            # even at production num_points; raise the scoped limit explicitly.
            vmem_limit_bytes=64 * 1024 * 1024,
        ),
    )(ce_diff, ce_w, plog, plab, piou)


# ----------------------------------------------------------------------------
# JAX glue (point sampling, matching indices)
# ----------------------------------------------------------------------------
def point_sample(inp, coords):
    """Bilinear sampling == F.grid_sample(inp, 2*coords-1, align_corners=False,
    padding_mode='zeros') for (N, C, H, W) input, (N, P, 2) coords in [0,1];
    returns (N, C, P)."""
    N, C, H, W = inp.shape
    g = 2.0 * coords - 1.0
    x = ((g[..., 0] + 1.0) * W - 1.0) / 2.0
    y = ((g[..., 1] + 1.0) * H - 1.0) / 2.0
    x0 = jnp.floor(x); x1 = x0 + 1.0
    y0 = jnp.floor(y); y1 = y0 + 1.0
    wx1 = x - x0; wx0 = 1.0 - wx1
    wy1 = y - y0; wy0 = 1.0 - wy1

    def gather(xi, yi):
        valid = (xi >= 0) & (xi < W) & (yi >= 0) & (yi < H)
        xc = jnp.clip(xi, 0, W - 1).astype(jnp.int32)
        yc = jnp.clip(yi, 0, H - 1).astype(jnp.int32)
        vals = jax.vmap(lambda im, yy, xx: im[:, yy, xx])(inp, yc, xc)   # (N, C, P)
        return vals * valid[:, None, :].astype(inp.dtype)

    return (gather(x0, y0) * (wx0 * wy0)[:, None, :]
            + gather(x1, y0) * (wx1 * wy0)[:, None, :]
            + gather(x0, y1) * (wx0 * wy1)[:, None, :]
            + gather(x1, y1) * (wx1 * wy1)[:, None, :])


def calculate_uncertainty(logits):
    return -jnp.abs(logits)


def get_uncertain_point_coords_with_randomness(key, coarse_logits, num_points,
                                               oversample_ratio,
                                               importance_sample_ratio):
    num_boxes = coarse_logits.shape[0]
    num_sampled = int(num_points * oversample_ratio)
    k1, k2 = jax.random.split(key)
    point_coords = jax.random.uniform(k1, (num_boxes, num_sampled, 2), jnp.float32)
    point_logits = point_sample(coarse_logits, point_coords)             # (N, 1, S)
    point_uncertainties = calculate_uncertainty(point_logits)
    num_uncertain = int(importance_sample_ratio * num_points)
    num_random = num_points - num_uncertain
    idx = jax.lax.top_k(point_uncertainties[:, 0, :], num_uncertain)[1]  # (N, K)
    picked = jnp.take_along_axis(
        point_coords,
        jnp.broadcast_to(idx[..., None], (num_boxes, num_uncertain, 2)), axis=1)
    if num_random > 0:
        rand = jax.random.uniform(k2, (num_boxes, num_random, 2), jnp.float32)
        picked = jnp.concatenate([picked, rand], axis=1)
    return picked


def identity_matcher(outputs, targets):
    # TODO(synk): Hungarian matcher (scipy linear_sum_assignment) has no clean
    # Pallas/JAX-on-TPU equivalent; replaced by deterministic identity matching.
    return [(np.arange(t['labels'].shape[0]), np.arange(t['labels'].shape[0]))
            for t in targets]


# ----------------------------------------------------------------------------
# SetCriterion
# ----------------------------------------------------------------------------
class SetCriterion:
    def __init__(self, num_classes, matcher, weight_dict, eos_coef, losses,
                 num_points, oversample_ratio, importance_sample_ratio):
        self.num_classes = num_classes
        self.matcher = matcher
        self.weight_dict = weight_dict
        self.eos_coef = eos_coef
        self.losses = losses
        # Matches torch __init__: empty_weight is created (last entry 0) but only
        # empty_object_weight is registered/used by the forward pass.
        self.empty_weight = jnp.ones((num_classes + 1,), jnp.float32).at[-1].set(0.0)
        self.empty_object_weight = jnp.array([1.0, 0.4], dtype=jnp.float32)
        self.num_points = num_points
        self.oversample_ratio = oversample_ratio
        self.importance_sample_ratio = importance_sample_ratio

    # ---- index bookkeeping (host-side numpy) ----
    def _get_src_permutation_idx(self, indices):
        batch_idx = np.concatenate([np.full_like(np.asarray(src), i)
                                    for i, (src, _) in enumerate(indices)])
        src_idx = np.concatenate([np.asarray(src) for src, _ in indices])
        return batch_idx, src_idx

    def _get_tgt_permutation_idx(self, indices):
        batch_idx = np.concatenate([np.full_like(np.asarray(tgt), i)
                                    for i, (_, tgt) in enumerate(indices)])
        tgt_idx = np.concatenate([np.asarray(tgt) for _, tgt in indices])
        return batch_idx, tgt_idx

    # ---- per-layer kernel-input preparation ----
    def _prepare_label_inputs(self, outputs, targets, indices):
        logits = outputs['pred_object_logits'].astype(jnp.float32)      # (B, Q, 2)
        B, Q, C = logits.shape
        assert C == 2
        batch_idx, src_idx = self._get_src_permutation_idx(indices)
        target_classes_o = jnp.concatenate(
            [t['labels'][np.asarray(J)] for t, (_, J) in zip(targets, indices)])
        target_classes = jnp.full((B, Q), self.num_classes, dtype=jnp.int32)
        target_classes = target_classes.at[batch_idx, src_idx].set(
            target_classes_o.astype(jnp.int32))
        # class index into the 2-way head: 0 = object (matched), 1 = no-object
        tgt = (target_classes == self.num_classes).astype(jnp.int32).reshape(-1)

        z = logits.reshape(B * Q, 2)
        diff = jnp.where(tgt == 0, z[:, 1] - z[:, 0], z[:, 0] - z[:, 1])
        w = jnp.where(tgt == 0, self.empty_object_weight[0], self.empty_object_weight[1])

        r_ce = _round_up(max(_cdiv(B * Q, 128), 1), 8)
        total = r_ce * 128
        diff = jnp.pad(diff, (0, total - B * Q)).reshape(r_ce, 128)
        w = jnp.pad(w, (0, total - B * Q)).reshape(r_ce, 128)            # 0 weight on pads
        return diff, w

    def _prepare_mask_inputs(self, outputs, targets, indices, padded_target_masks, rng):
        src_batch, src_idx = self._get_src_permutation_idx(indices)
        tgt_batch, tgt_idx = self._get_tgt_permutation_idx(indices)

        src_masks = outputs['pred_masks'][src_batch, src_idx].astype(jnp.float32)      # (N,Hm,Wm)
        src_iou = outputs['pred_ious'][src_batch, src_idx][:, 0].astype(jnp.float32)   # (N,)
        target_masks = padded_target_masks[tgt_batch, tgt_idx]                          # (N,Ht,Wt)

        src_masks = src_masks[:, None]
        target_masks = target_masks[:, None]

        # TODO(synk): point sampling stays in plain JAX (data-dependent bilinear
        # gather); an in-kernel MXU formulation would need a sparse bilinear-weight
        # matmul, which is not expressible with a rectangular BlockSpec.
        point_coords = get_uncertain_point_coords_with_randomness(
            rng, src_masks, self.num_points, self.oversample_ratio,
            self.importance_sample_ratio)
        point_labels = point_sample(target_masks, point_coords)[:, 0, :]   # (N, P)
        point_logits = point_sample(src_masks, point_coords)[:, 0, :]      # (N, P)
        return point_logits, point_labels, src_iou, src_masks.shape[0]

    # ---- forward ----
    def forward(self, outputs, targets, rng):
        outputs_without_aux = {k: v for k, v in outputs.items() if k != 'aux_outputs'}
        aux_list = list(outputs.get('aux_outputs', []))

        layer_outputs = [outputs_without_aux] + aux_list
        layer_suffixes = [''] + [f'_{i}' for i in range(len(aux_list))]
        layer_indices = [self.matcher(lo, targets) for lo in layer_outputs]

        num_masks = sum(int(t['labels'].shape[0]) for t in targets)
        # TODO(synk): torch.distributed all_reduce of num_masks skipped (single host).
        num_masks = max(float(num_masks) / 1.0, 1.0)

        use_labels = 'labels' in self.losses
        use_masks = 'masks' in self.losses

        # Target masks zero-padded ONCE, host-side (numpy), reused for all layers.
        padded_target_masks = None
        if use_masks:
            masks_np = [np.asarray(t['masks'], dtype=np.float32) for t in targets]
            max_n = max(m.shape[0] for m in masks_np)
            ht = max(m.shape[1] for m in masks_np)
            wt = max(m.shape[2] for m in masks_np)
            padded = np.zeros((len(masks_np), max_n, ht, wt), np.float32)
            for i, m in enumerate(masks_np):
                padded[i, :m.shape[0], :m.shape[1], :m.shape[2]] = m
            padded_target_masks = jnp.asarray(padded)

        L = len(layer_outputs)
        rngs = jax.random.split(rng, L)   # fresh point-sampling randomness per layer

        ce_diffs, ce_ws, plogs, plabs, pious = [], [], [], [], []
        n_true = 0
        for lo, li, lr in zip(layer_outputs, layer_indices, rngs):
            if use_labels:
                d, w = self._prepare_label_inputs(lo, targets, li)
            else:
                d = jnp.zeros((8, 128), jnp.float32)
                w = jnp.zeros((8, 128), jnp.float32)
            ce_diffs.append(d)
            ce_ws.append(w)
            if use_masks:
                plg, plb, iou, n_true = self._prepare_mask_inputs(
                    lo, targets, li, padded_target_masks, lr)
            else:
                plg = jnp.zeros((1, self.num_points), jnp.float32)
                plb = jnp.zeros((1, self.num_points), jnp.float32)
                iou = jnp.zeros((1,), jnp.float32)
            plogs.append(plg)
            plabs.append(plb)
            pious.append(iou)

        # pad + stack for the single fused kernel call
        n_rows = plogs[0].shape[0]
        p_true = self.num_points
        n_pad8 = _round_up(max(n_rows, 1), 8)
        tile_rows = min(n_pad8, 128)            # keeps blocks small for v7x 64 MiB VMEM
        n_pad = _round_up(n_pad8, tile_rows)
        p_pad = _round_up(p_true, 128)

        def pad_points(a):
            return jnp.pad(a, ((0, n_pad - a.shape[0]), (0, p_pad - a.shape[1])))

        plog = jnp.stack([pad_points(a) for a in plogs]).astype(jnp.float32)
        plab = jnp.stack([pad_points(a) for a in plabs]).astype(jnp.float32)
        piou = jnp.stack([jnp.pad(a, (0, n_pad - a.shape[0]))[:, None]
                          for a in pious]).astype(jnp.float32)
        ce_diff = jnp.stack(ce_diffs).astype(jnp.float32)
        ce_w = jnp.stack(ce_ws).astype(jnp.float32)

        out = fused_criterion_losses(
            ce_diff, ce_w, plog, plab, piou,
            num_points=p_true,
            num_valid_rows=(n_true if use_masks else 0),
            tile_rows=tile_rows)

        # trivial scalar finalization (divisions) in JAX
        losses = {}
        for k, suffix in enumerate(layer_suffixes):
            row = out[k, 0]                     # (128,)
            if use_labels:
                losses['loss_object_ce' + suffix] = row[0] / row[1]
            if use_masks:
                losses['loss_mask' + suffix] = row[2] / num_masks
                losses['loss_dice' + suffix] = row[3] / num_masks
                cnt = row[5]
                losses['loss_iou' + suffix] = jnp.where(
                    cnt > 0.0, row[4] / jnp.maximum(cnt, 1.0), 0.0)
        return losses


# ----------------------------------------------------------------------------
# Example run
# ----------------------------------------------------------------------------
if __name__ == "__main__":
    key = jax.random.PRNGKey(0)
    keys = jax.random.split(key, 8)

    B, Q = 2, 8
    num_classes = 5
    Hm = Wm = 16       # predicted mask resolution
    Ht = Wt = 32       # ground-truth mask resolution
    n_targets = [3, 2]
    num_aux = 2        # exercise the fused aux-layer path

    def make_outputs(k):
        k1, k2, k3 = jax.random.split(k, 3)
        return {
            'pred_object_logits': jax.random.normal(k1, (B, Q, 2), jnp.float32),
            'pred_masks': jax.random.normal(k2, (B, Q, Hm, Wm), jnp.float32),
            'pred_ious': jax.nn.sigmoid(jax.random.normal(k3, (B, Q, 1), jnp.float32)),
        }

    outputs = make_outputs(keys[0])
    outputs['aux_outputs'] = [make_outputs(keys[1 + i]) for i in range(num_aux)]

    k_lab0, k_m0 = jax.random.split(keys[4])
    k_lab1, k_m1 = jax.random.split(keys[5])
    targets = [
        {'labels': jax.random.randint(k_lab0, (n_targets[0],), 0, num_classes),
         'masks': (jax.random.uniform(k_m0, (n_targets[0], Ht, Wt)) > 0.5).astype(jnp.float32)},
        {'labels': jax.random.randint(k_lab1, (n_targets[1],), 0, num_classes),
         'masks': (jax.random.uniform(k_m1, (n_targets[1], Ht, Wt)) > 0.5).astype(jnp.float32)},
    ]

    criterion = SetCriterion(
        num_classes=num_classes,
        matcher=identity_matcher,
        weight_dict={'loss_object_ce': 2.0, 'loss_mask': 5.0,
                     'loss_dice': 5.0, 'loss_iou': 2.0},
        eos_coef=0.1,
        losses=['labels', 'masks'],
        num_points=16,
        oversample_ratio=3.0,
        importance_sample_ratio=0.75,
    )

    losses = criterion.forward(outputs, targets, rng=keys[6])
    losses = {k: jax.block_until_ready(v) for k, v in losses.items()}
    expected_keys = 4 * (1 + num_aux)
    assert len(losses) == expected_keys, f"expected {expected_keys} losses, got {len(losses)}"
    for k, v in losses.items():
        assert np.isfinite(float(v)), f"{k} is not finite: {v}"
    print("KERNEL_OK")
</pallas_src>

<mosaic_0001>
module attributes {stable_mosaic.version = 11 : i64} {
  func.func @_fused_loss_kernel(%arg0: i32, %arg1: i32, %arg2: memref<1x8x128xf32, #tpu.memory_space<vmem>>, %arg3: memref<1x8x128xf32, #tpu.memory_space<vmem>>, %arg4: memref<1x8x128xf32, #tpu.memory_space<vmem>>, %arg5: memref<1x8x128xf32, #tpu.memory_space<vmem>>, %arg6: memref<1x8x1xf32, #tpu.memory_space<vmem>>, %arg7: memref<1x8x128xf32, #tpu.memory_space<vmem>>) attributes {dimension_semantics = [#tpu.dimension_semantics<parallel>, #tpu.dimension_semantics<arbitrary>], iteration_bounds = array<i64: 3, 1>, scalar_prefetch = 0 : i64, scratch_operands = 0 : i64, tpu.core_type = #tpu.core_type<tc>, window_params = [{transform_indices = @transform_0, window_bounds = array<i64: 1, 8, 128>}, {transform_indices = @transform_1, window_bounds = array<i64: 1, 8, 128>}, {transform_indices = @transform_2, window_bounds = array<i64: 1, 8, 128>}, {transform_indices = @transform_3, window_bounds = array<i64: 1, 8, 128>}, {transform_indices = @transform_4, window_bounds = array<i64: 1, 8, 1>}, {transform_indices = @transform_5, window_bounds = array<i64: 1, 8, 128>}]} {
    %0 = tpu.iota {dimensions = array<i32: 2>} : vector<1x8x128xi32>
    %c0_i32 = arith.constant 0 : i32
    %1 = arith.cmpi eq, %arg1, %c0_i32 : i32
    %2 = arith.extui %1 : i1 to i32
    %c0_i32_0 = arith.constant 0 : i32
    %3 = arith.cmpi ne, %2, %c0_i32_0 : i32
    scf.if %3 {
      %c0_39 = arith.constant 0 : index
      %c0_40 = arith.constant 0 : index
      %c0_41 = arith.constant 0 : index
      %136 = vector.load %arg2[%c0_39, %c0_40, %c0_41] : memref<1x8x128xf32, #tpu.memory_space<vmem>>, vector<1x8x128xf32>
      %137 = vector.shape_cast %136 : vector<1x8x128xf32> to vector<8x128xf32>
      %c0_42 = arith.constant 0 : index
      %c0_43 = arith.constant 0 : index
      %c0_44 = arith.constant 0 : index
      %138 = vector.load %arg3[%c0_42, %c0_43, %c0_44] : memref<1x8x128xf32, #tpu.memory_space<vmem>>, vector<1x8x128xf32>
      %139 = vector.shape_cast %138 : vector<1x8x128xf32> to vector<8x128xf32>
      %cst_45 = arith.constant 0.000000e+00 : f32
      %140 = vector.broadcast %cst_45 : f32 to vector<8x128xf32>
      %141 = arith.maximumf %137, %140 : vector<8x128xf32>
      %142 = math.absf %137 : vector<8x128xf32>
      %cst_46 = arith.constant 0.000000e+00 : f32
      %143 = vector.broadcast %cst_46 : f32 to vector<8x128xf32>
      %144 = arith.subf %143, %142 : vector<8x128xf32>
      %145 = math.exp %144 : vector<8x128xf32>
      %cst_47 = arith.constant 1.000000e+00 : f32
      %146 = vector.broadcast %cst_47 : f32 to vector<8x128xf32>
      %147 = arith.addf %146, %145 : vector<8x128xf32>
      %148 = math.log %147 : vector<8x128xf32>
      %149 = arith.addf %141, %148 : vector<8x128xf32>
      %150 = arith.mulf %139, %149 : vector<8x128xf32>
      %cst_48 = arith.constant dense<0.000000e+00> : vector<8xf32>
      %151 = vector.multi_reduction <add>, %150, %cst_48 [1] : vector<8x128xf32> to vector<8xf32>
      %152 = vector.shape_cast %151 : vector<8xf32> to vector<8x1xf32>
      %cst_49 = arith.constant dense<0.000000e+00> : vector<1xf32>
      %153 = vector.multi_reduction <add>, %152, %cst_49 [0] : vector<8x1xf32> to vector<1xf32>
      %154 = vector.shape_cast %153 : vector<1xf32> to vector<1x1xf32>
      %cst_50 = arith.constant dense<0.000000e+00> : vector<8xf32>
      %155 = vector.multi_reduction <add>, %139, %cst_50 [1] : vector<8x128xf32> to vector<8xf32>
      %156 = vector.shape_cast %155 : vector<8xf32> to vector<8x1xf32>
      %cst_51 = arith.constant dense<0.000000e+00> : vector<1xf32>
      %157 = vector.multi_reduction <add>, %156, %cst_51 [0] : vector<8x1xf32> to vector<1xf32>
      %158 = vector.shape_cast %157 : vector<1xf32> to vector<1x1xf32>
      %c0_i32_52 = arith.constant 0 : i32
      %159 = vector.broadcast %c0_i32_52 : i32 to vector<1x8x128xi32>
      %160 = arith.cmpi eq, %0, %159 : vector<1x8x128xi32>
      %161 = arith.extui %160 : vector<1x8x128xi1> to vector<1x8x128xi32>
      %162 = arith.sitofp %161 : vector<1x8x128xi32> to vector<1x8x128xf32>
      %163 = vector.shape_cast %154 : vector<1x1xf32> to vector<1x1x1xf32>
      %164 = vector.broadcast %163 : vector<1x1x1xf32> to vector<1x8x128xf32>
      %165 = arith.mulf %164, %162 : vector<1x8x128xf32>
      %c1_i32 = arith.constant 1 : i32
      %166 = vector.broadcast %c1_i32 : i32 to vector<1x8x128xi32>
      %167 = arith.cmpi eq, %0, %166 : vector<1x8x128xi32>
      %168 = arith.extui %167 : vector<1x8x128xi1> to vector<1x8x128xi32>
      %169 = arith.sitofp %168 : vector<1x8x128xi32> to vector<1x8x128xf32>
      %170 = vector.shape_cast %158 : vector<1x1xf32> to vector<1x1x1xf32>
      %171 = vector.broadcast %170 : vector<1x1x1xf32> to vector<1x8x128xf32>
      %172 = arith.mulf %171, %169 : vector<1x8x128xf32>
      %173 = arith.addf %165, %172 : vector<1x8x128xf32>
      %c0_53 = arith.constant 0 : index
      %c0_54 = arith.constant 0 : index
      %c0_55 = arith.constant 0 : index
      %174 = vector.load %arg7[%c0_53, %c0_54, %c0_55] : memref<1x8x128xf32, #tpu.memory_space<vmem>>, vector<1x8x128xf32>
      tpu.vector_store %arg7[%c0_53, %c0_54, %c0_55], %173 {strides = array<i32>} : memref<1x8x128xf32, #tpu.memory_space<vmem>>, vector<1x8x128xf32>,
    } else {
    }
    %c0 = arith.constant 0 : index
    %c0_1 = arith.constant 0 : index
    %c0_2 = arith.constant 0 : index
    %4 = vector.load %arg4[%c0, %c0_1, %c0_2] : memref<1x8x128xf32, #tpu.memory_space<vmem>>, vector<1x8x128xf32>
    %5 = vector.shape_cast %4 : vector<1x8x128xf32> to vector<8x128xf32>
    %c0_3 = arith.constant 0 : index
    %c0_4 = arith.constant 0 : index
    %c0_5 = arith.constant 0 : index
    %6 = vector.load %arg5[%c0_3, %c0_4, %c0_5] : memref<1x8x128xf32, #tpu.memory_space<vmem>>, vector<1x8x128xf32>
    %7 = vector.shape_cast %6 : vector<1x8x128xf32> to vector<8x128xf32>
    %8 = tpu.iota {dimensions = array<i32: 1>} : vector<8x128xi32>
    %c16_i32 = arith.constant 16 : i32
    %9 = vector.broadcast %c16_i32 : i32 to vector<8x128xi32>
    %10 = arith.cmpi slt, %8, %9 : vector<8x128xi32>
    %11 = arith.extui %10 : vector<8x128xi1> to vector<8x128xi32>
    %12 = arith.sitofp %11 : vector<8x128xi32> to vector<8x128xf32>
    %c8_i32 = arith.constant 8 : i32
    %13 = arith.muli %arg1, %c8_i32 : i32
    %14 = tpu.iota {dimensions = array<i32: 0>} : vector<8x1xi32>
    %15 = vector.broadcast %13 : i32 to vector<8x1xi32>
    %16 = arith.addi %15, %14 : vector<8x1xi32>
    %c5_i32 = arith.constant 5 : i32
    %17 = vector.broadcast %c5_i32 : i32 to vector<8x1xi32>
    %18 = arith.cmpi slt, %16, %17 : vector<8x1xi32>
    %19 = arith.extui %18 : vector<8x1xi1> to vector<8x1xi32>
    %20 = arith.sitofp %19 : vector<8x1xi32> to vector<8x1xf32>
    %21 = math.absf %5 : vector<8x128xf32>
    %cst = arith.constant 0.000000e+00 : f32
    %22 = vector.broadcast %cst : f32 to vector<8x128xf32>
    %23 = arith.subf %22, %21 : vector<8x128xf32>
    %24 = math.exp %23 : vector<8x128xf32>
    %cst_6 = arith.constant 1.000000e+00 : f32
    %25 = vector.broadcast %cst_6 : f32 to vector<8x128xf32>
    %26 = arith.addf %25, %24 : vector<8x128xf32>
    %27 = math.log %26 : vector<8x128xf32>
    %cst_7 = arith.constant 0.000000e+00 : f32
    %28 = vector.broadcast %cst_7 : f32 to vector<8x128xf32>
    %29 = arith.maximumf %5, %28 : vector<8x128xf32>
    %30 = arith.mulf %5, %7 : vector<8x128xf32>
    %31 = arith.subf %29, %30 : vector<8x128xf32>
    %32 = arith.addf %31, %27 : vector<8x128xf32>
    %33 = arith.mulf %32, %12 : vector<8x128xf32>
    %cst_8 = arith.constant dense<0.000000e+00> : vector<8xf32>
    %34 = vector.multi_reduction <add>, %33, %cst_8 [1] : vector<8x128xf32> to vector<8xf32>
    %35 = vector.shape_cast %34 : vector<8xf32> to vector<8x1xf32>
    %cst_9 = arith.constant 6.250000e-02 : f32
    %36 = vector.broadcast %cst_9 : f32 to vector<8x1xf32>
    %37 = arith.mulf %35, %36 : vector<8x1xf32>
    %38 = arith.mulf %37, %20 : vector<8x1xf32>
    %cst_10 = arith.constant dense<0.000000e+00> : vector<1xf32>
    %39 = vector.multi_reduction <add>, %38, %cst_10 [0] : vector<8x1xf32> to vector<1xf32>
    %40 = vector.shape_cast %39 : vector<1xf32> to vector<1x1xf32>
    %cst_11 = arith.constant 1.000000e+00 : f32
    %41 = vector.broadcast %cst_11 : f32 to vector<8x128xf32>
    %42 = arith.addf %41, %24 : vector<8x128xf32>
    %43 = tpu.reciprocal %42 {approx = true} : vector<8x128xf32> -> vector<8x128xf32>
    %cst_12 = arith.constant 0.000000e+00 : f32
    %44 = vector.broadcast %cst_12 : f32 to vector<8x128xf32>
    %45 = arith.cmpf oge, %5, %44 : vector<8x128xf32>
    %46 = arith.mulf %24, %43 : vector<8x128xf32>
    %47 = arith.select %45, %43, %46 : vector<8x128xi1>, vector<8x128xf32>
    %48 = arith.mulf %47, %12 : vector<8x128xf32>
    %49 = arith.mulf %7, %12 : vector<8x128xf32>
    %50 = arith.mulf %48, %49 : vector<8x128xf32>
    %cst_13 = arith.constant dense<0.000000e+00> : vector<8xf32>
    %51 = vector.multi_reduction <add>, %50, %cst_13 [1] : vector<8x128xf32> to vector<8xf32>
    %52 = vector.shape_cast %51 : vector<8xf32> to vector<8x1xf32>
    %cst_14 = arith.constant dense<0.000000e+00> : vector<8xf32>
    %53 = vector.multi_reduction <add>, %48, %cst_14 [1] : vector<8x128xf32> to vector<8xf32>
    %54 = vector.shape_cast %53 : vector<8xf32> to vector<8x1xf32>
    %cst_15 = arith.constant dense<0.000000e+00> : vector<8xf32>
    %55 = vector.multi_reduction <add>, %49, %cst_15 [1] : vector<8x128xf32> to vector<8xf32>
    %56 = vector.shape_cast %55 : vector<8xf32> to vector<8x1xf32>
    %cst_16 = arith.constant 2.000000e+00 : f32
    %57 = vector.broadcast %cst_16 : f32 to vector<8x1xf32>
    %58 = arith.mulf %57, %52 : vector<8x1xf32>
    %cst_17 = arith.constant 1.000000e+00 : f32
    %59 = vector.broadcast %cst_17 : f32 to vector<8x1xf32>
    %60 = arith.addf %58, %59 : vector<8x1xf32>
    %61 = arith.addf %54, %56 : vector<8x1xf32>
    %cst_18 = arith.constant 1.000000e+00 : f32
    %62 = vector.broadcast %cst_18 : f32 to vector<8x1xf32>
    %63 = arith.addf %61, %62 : vector<8x1xf32>
    %64 = tpu.reciprocal %63 {approx = true} : vector<8x1xf32> -> vector<8x1xf32>
    %65 = arith.mulf %60, %64 : vector<8x1xf32>
    %cst_19 = arith.constant 1.000000e+00 : f32
    %66 = vector.broadcast %cst_19 : f32 to vector<8x1xf32>
    %67 = arith.subf %66, %65 : vector<8x1xf32>
    %68 = arith.mulf %67, %20 : vector<8x1xf32>
    %cst_20 = arith.constant dense<0.000000e+00> : vector<1xf32>
    %69 = vector.multi_reduction <add>, %68, %cst_20 [0] : vector<8x1xf32> to vector<1xf32>
    %70 = vector.shape_cast %69 : vector<1xf32> to vector<1x1xf32>
    %cst_21 = arith.constant 5.000000e-01 : f32
    %71 = vector.broadcast %cst_21 : f32 to vector<8x128xf32>
    %72 = arith.cmpf ogt, %48, %71 : vector<8x128xf32>
    %73 = arith.extui %72 : vector<8x128xi1> to vector<8x128xi32>
    %74 = arith.sitofp %73 : vector<8x128xi32> to vector<8x128xf32>
    %75 = arith.mulf %74, %49 : vector<8x128xf32>
    %cst_22 = arith.constant dense<0.000000e+00> : vector<8xf32>
    %76 = vector.multi_reduction <add>, %75, %cst_22 [1] : vector<8x128xf32> to vector<8xf32>
    %77 = vector.shape_cast %76 : vector<8xf32> to vector<8x1xf32>
    %cst_23 = arith.constant dense<0.000000e+00> : vector<8xf32>
    %78 = vector.multi_reduction <add>, %74, %cst_23 [1] : vector<8x128xf32> to vector<8xf32>
    %79 = vector.shape_cast %78 : vector<8xf32> to vector<8x1xf32>
    %80 = arith.addf %79, %56 : vector<8x1xf32>
    %81 = arith.subf %80, %77 : vector<8x1xf32>
    %cst_24 = arith.constant 0.000000e+00 : f32
    %82 = vector.broadcast %cst_24 : f32 to vector<8x1xf32>
    %83 = arith.cmpf ogt, %81, %82 : vector<8x1xf32>
    %84 = tpu.reciprocal %81 {approx = true} : vector<8x1xf32> -> vector<8x1xf32>
    %85 = arith.mulf %77, %84 : vector<8x1xf32>
    %cst_25 = arith.constant 0.000000e+00 : f32
    %86 = vector.broadcast %cst_25 : f32 to vector<8x1xf32>
    %87 = arith.select %83, %85, %86 : vector<8x1xi1>, vector<8x1xf32>
    %cst_26 = arith.constant 0.000000e+00 : f32
    %88 = vector.broadcast %cst_26 : f32 to vector<8x1xf32>
    %89 = arith.cmpf ogt, %87, %88 : vector<8x1xf32>
    %90 = arith.extui %89 : vector<8x1xi1> to vector<8x1xi32>
    %91 = arith.sitofp %90 : vector<8x1xi32> to vector<8x1xf32>
    %92 = arith.mulf %91, %20 : vector<8x1xf32>
    %cst_27 = arith.constant dense<0.000000e+00> : vector<1xf32>
    %93 = vector.multi_reduction <add>, %92, %cst_27 [0] : vector<8x1xf32> to vector<1xf32>
    %94 = vector.shape_cast %93 : vector<1xf32> to vector<1x1xf32>
    %c0_28 = arith.constant 0 : index
    %c0_29 = arith.constant 0 : index
    %c0_30 = arith.constant 0 : index
    %95 = vector.load %arg6[%c0_28, %c0_29, %c0_30] : memref<1x8x1xf32, #tpu.memory_space<vmem>>, vector<1x8x1xf32>
    %96 = vector.shape_cast %95 : vector<1x8x1xf32> to vector<8x1xf32>
    %97 = arith.subf %96, %87 : vector<8x1xf32>
    %98 = math.absf %97 : vector<8x1xf32>
    %99 = arith.mulf %98, %92 : vector<8x1xf32>
    %cst_31 = arith.constant dense<0.000000e+00> : vector<1xf32>
    %100 = vector.multi_reduction <add>, %99, %cst_31 [0] : vector<8x1xf32> to vector<1xf32>
    %101 = vector.shape_cast %100 : vector<1xf32> to vector<1x1xf32>
    %c0_32 = arith.constant 0 : index
    %c0_33 = arith.constant 0 : index
    %c0_34 = arith.constant 0 : index
    %102 = vector.load %arg7[%c0_32, %c0_33, %c0_34] : memref<1x8x128xf32, #tpu.memory_space<vmem>>, vector<1x8x128xf32>
    %c2_i32 = arith.constant 2 : i32
    %103 = vector.broadcast %c2_i32 : i32 to vector<1x8x128xi32>
    %104 = arith.cmpi eq, %0, %103 : vector<1x8x128xi32>
    %105 = arith.extui %104 : vector<1x8x128xi1> to vector<1x8x128xi32>
    %106 = arith.sitofp %105 : vector<1x8x128xi32> to vector<1x8x128xf32>
    %107 = vector.shape_cast %40 : vector<1x1xf32> to vector<1x1x1xf32>
    %108 = vector.broadcast %107 : vector<1x1x1xf32> to vector<1x8x128xf32>
    %109 = arith.mulf %108, %106 : vector<1x8x128xf32>
    %c3_i32 = arith.constant 3 : i32
    %110 = vector.broadcast %c3_i32 : i32 to vector<1x8x128xi32>
    %111 = arith.cmpi eq, %0, %110 : vector<1x8x128xi32>
    %112 = arith.extui %111 : vector<1x8x128xi1> to vector<1x8x128xi32>
    %113 = arith.sitofp %112 : vector<1x8x128xi32> to vector<1x8x128xf32>
    %114 = vector.shape_cast %70 : vector<1x1xf32> to vector<1x1x1xf32>
    %115 = vector.broadcast %114 : vector<1x1x1xf32> to vector<1x8x128xf32>
    %116 = arith.mulf %115, %113 : vector<1x8x128xf32>
    %117 = arith.addf %109, %116 : vector<1x8x128xf32>
    %c4_i32 = arith.constant 4 : i32
    %118 = vector.broadcast %c4_i32 : i32 to vector<1x8x128xi32>
    %119 = arith.cmpi eq, %0, %118 : vector<1x8x128xi32>
    %120 = arith.extui %119 : vector<1x8x128xi1> to vector<1x8x128xi32>
    %121 = arith.sitofp %120 : vector<1x8x128xi32> to vector<1x8x128xf32>
    %122 = vector.shape_cast %101 : vector<1x1xf32> to vector<1x1x1xf32>
    %123 = vector.broadcast %122 : vector<1x1x1xf32> to vector<1x8x128xf32>
    %124 = arith.mulf %123, %121 : vector<1x8x128xf32>
    %125 = arith.addf %117, %124 : vector<1x8x128xf32>
    %c5_i32_35 = arith.constant 5 : i32
    %126 = vector.broadcast %c5_i32_35 : i32 to vector<1x8x128xi32>
    %127 = arith.cmpi eq, %0, %126 : vector<1x8x128xi32>
    %128 = arith.extui %127 : vector<1x8x128xi1> to vector<1x8x128xi32>
    %129 = arith.sitofp %128 : vector<1x8x128xi32> to vector<1x8x128xf32>
    %130 = vector.shape_cast %94 : vector<1x1xf32> to vector<1x1x1xf32>
    %131 = vector.broadcast %130 : vector<1x1x1xf32> to vector<1x8x128xf32>
    %132 = arith.mulf %131, %129 : vector<1x8x128xf32>
    %133 = arith.addf %125, %132 : vector<1x8x128xf32>
    %134 = arith.addf %102, %133 : vector<1x8x128xf32>
    %c0_36 = arith.constant 0 : index
    %c0_37 = arith.constant 0 : index
    %c0_38 = arith.constant 0 : index
    %135 = vector.load %arg7[%c0_36, %c0_37, %c0_38] : memref<1x8x128xf32, #tpu.memory_space<vmem>>, vector<1x8x128xf32>
    tpu.vector_store %arg7[%c0_36, %c0_37, %c0_38], %134 {strides = array<i32>} : memref<1x8x128xf32, #tpu.memory_space<vmem>>, vector<1x8x128xf32>,
    return
  }
  func.func @transform_0(%arg0: i32, %arg1: i32) -> (i32, i32, i32) {
    %c0_i32 = arith.constant 0 : i32
    %c0_i32_0 = arith.constant 0 : i32
    %c0_i32_1 = arith.constant 0 : i32
    return %arg0, %c0_i32, %c0_i32_0 : i32, i32, i32
  }
  func.func @transform_1(%arg0: i32, %arg1: i32) -> (i32, i32, i32) {
    %c0_i32 = arith.constant 0 : i32
    %c0_i32_0 = arith.constant 0 : i32
    %c0_i32_1 = arith.constant 0 : i32
    return %arg0, %c0_i32, %c0_i32_0 : i32, i32, i32
  }
  func.func @transform_2(%arg0: i32, %arg1: i32) -> (i32, i32, i32) {
    %c0_i32 = arith.constant 0 : i32
    %c0_i32_0 = arith.constant 0 : i32
    return %arg0, %arg1, %c0_i32 : i32, i32, i32
  }
  func.func @transform_3(%arg0: i32, %arg1: i32) -> (i32, i32, i32) {
    %c0_i32 = arith.constant 0 : i32
    %c0_i32_0 = arith.constant 0 : i32
    return %arg0, %arg1, %c0_i32 : i32, i32, i32
  }
  func.func @transform_4(%arg0: i32, %arg1: i32) -> (i32, i32, i32) {
    %c0_i32 = arith.constant 0 : i32
    %c0_i32_0 = arith.constant 0 : i32
    return %arg0, %arg1, %c0_i32 : i32, i32, i32
  }
  func.func @transform_5(%arg0: i32, %arg1: i32) -> (i32, i32, i32) {
    %c0_i32 = arith.constant 0 : i32
    %c0_i32_0 = arith.constant 0 : i32
    %c0_i32_1 = arith.constant 0 : i32
    return %arg0, %c0_i32, %c0_i32_0 : i32, i32, i32
  }
}

</mosaic_0001>

<llo_original>
// kernel: tpu_custom_call.1
$region0: #{tpu_custom_call.1}
  #allocation0 [shape = 'u32[]', space=smem, size = 0x4, offset = 0x4, fixed_abs, tag = 'smem constant byte address 0x4 - core index']
  #allocation1 [shape = 'u32[144,128]{1,0:T(1,128)}', space=vmem, size = 0x12000, scoped, tag = 'internal scratch']
  %s0 = inlined_call_operand.hbm [shape: f32[3,8,128], index: 0, kind: input, shape index: {}]
  %s1 = inlined_call_operand.hbm [shape: f32[3,8,128], index: 1, kind: input, shape index: {}]
  %s2 = inlined_call_operand.hbm [shape: f32[3,8,128], index: 2, kind: input, shape index: {}]
  %s3 = inlined_call_operand.hbm [shape: f32[3,8,128], index: 3, kind: input, shape index: {}]
  %s4 = inlined_call_operand.hbm [shape: f32[3,8,1], index: 4, kind: input, shape index: {}]
  %s5 = inlined_call_operand.hbm [shape: f32[3,8,128], index: 5, kind: output, shape index: {}]
  %s6 = sld [smem:[#allocation0]]
  $region77: #{tpu_custom_call.1} parent=0
    _
  %s8 = ssub.s32 1, %s6
  %s9 = scalar_select 0, %s8, %s6
  $region1: #{tpu_custom_call.1} parent=0
    #allocation2 [shape = 'u8[8192]{0}', space=vmem, size = 0x2000, scoped, tag = 'input window, operand 0']
    #allocation3 [shape = 's32[2]{0}', space=sflag, size = 0x8, scoped, tag = 'scoped memory for tpu_custom_call.1']
    #allocation4 [shape = 's32[2]{0}', space=sflag, size = 0x8, scoped, tag = 'scoped memory for tpu_custom_call.1']
    #allocation5 [shape = 'u8[8192]{0}', space=vmem, size = 0x2000, scoped, tag = 'input window, operand 1']
    #allocation6 [shape = 's32[2]{0}', space=sflag, size = 0x8, scoped, tag = 'scoped memory for tpu_custom_call.1']
    #allocation7 [shape = 'u8[8192]{0}', space=vmem, size = 0x2000, scoped, tag = 'input window, operand 2']
    #allocation8 [shape = 'u8[8192]{0}', space=vmem, size = 0x2000, scoped, tag = 'input window, operand 3']
    #allocation9 [shape = 's32[2]{0}', space=sflag, size = 0x8, scoped, tag = 'scoped memory for tpu_custom_call.1']
    #allocation10 [shape = 'u8[8192]{0}', space=vmem, size = 0x2000, scoped, tag = 'input window, operand 4']
    #allocation11 [shape = 'u8[8192]{0}', space=vmem, size = 0x2000, scoped, tag = 'output window, operand 0']
    %10 = vsyncpa [#allocation3], 0
    %s11 = scalar_lea.sflag [#allocation3], 1
    %12 = vsyncpa %s11, 0
    %13 = vsyncpa [#allocation6], 0
    %s14 = scalar_lea.sflag [#allocation6], 1
    %15 = vsyncpa %s14, 0
    %16 = vsyncpa [#allocation9], 0
    %s17 = scalar_lea.sflag [#allocation9], 1
    %18 = vsyncpa %s17, 0
    %19 = vsyncpa [#allocation4], 0
    %s20 = scalar_lea.sflag [#allocation4], 1
    %21 = vsyncpa %s20, 0
    loop: start=0, step=1, limit=5
    $region2: #{tpu_custom_call.1} parent=1 // loop_pre_header
      _
    $region3: #{tpu_custom_call.1} parent=1 // loop_header
      %s23 = sphi 0, %s27
      %p24 = scmp.ge.s32.totalorder %s23, 5
      %s30 = sphi 0, %s42
      %s31 = sphi 0, %s38
      %s32 = sphi 0, %s30
      %s33 = sphi 0, %s31
      %s34 = sphi 0, %s32
      %s35 = sphi 0, %s33
      %s45 = sphi 0, %s47
      %s48 = sphi 0, %s45
      %s49 = sphi 0, %s48
      %s65 = sphi 0, %s49
      %s71 = sphi 0, %s73
      %s74 = sphi 0, %s71
      %s75 = sphi 0, %s74
      %s91 = sphi 0, %s75
      %s99 = sphi 0, %s101
      %s102 = sphi 0, %s99
      %s103 = sphi 0, %s102
      %s119 = sphi 0, %s103
      %s127 = sphi 0, %s129
      %s130 = sphi 0, %s127
      %s131 = sphi 0, %s130
      %s147 = sphi 0, %s131
      %s155 = sphi 0, %s157
      %s158 = sphi 0, %s155
      %s159 = sphi 0, %s158
      %s175 = sphi 0, %s159
      %s181 = sphi 0, %s183
      %s184 = sphi 0, %s181
      %s185 = sphi 0, %s184
      %s201 = sphi 0, %s185
    $region4: #{tpu_custom_call.1} parent=1 // loop_header_branch
      %26 = sbr.rel (%p24) target = $region8
    $region5: #{tpu_custom_call.1} parent=1 // loop_body
      %s28 = ssub.s32 %s23, 1
      %s29 = ssub.s32 %s23, 2
      %s36 = sadd.s32 1, %s31
      %p37 = scmp.ge.s32.totalorder %s36, 1
      %s38 = scalar_select %p37, 0, %s36
      %s39 = sadd.s32 1, %s30
      %s40 = scalar_select %p37, %s39, %s30
      %p41 = scmp.ge.s32.totalorder %s40, 3
      %s42 = scalar_select %p41, 0, %s40
      %s43 = ssub.s32 %s30, %s42
      %p44 = scmp.eq.s32.totalorder %s43, 0
      %s46 = sadd.s32 %s45, 1
      %s47 = scalar_select %p44, %s45, %s46
      %p50 = pneg %p44
      %p51 = scmp.eq.s32.totalorder %s23, 2
      %p52 = por %p50, %p51
      %p53 = scmp.ne.s32.totalorder %s45, %s48
      %p54 = scmp.eq.s32.totalorder %s23, 0
      %p55 = por %p53, %p54
      %p56 = scmp.ne.s32.totalorder %s45, %s48
      %p57 = scmp.eq.s32.totalorder %s28, 2
      %p58 = por %p56, %p57
      %p59 = scmp.ne.s32.totalorder %s48, %s49
      %p60 = scmp.eq.s32.totalorder %s28, 0
      %p61 = por %p59, %p60
      %p62 = scmp.ne.s32.totalorder %s48, %s49
      %p63 = scmp.eq.s32.totalorder %s29, 2
      %p64 = por %p62, %p63
      %p66 = scmp.ne.s32.totalorder %s49, %s65
      %p67 = scmp.eq.s32.totalorder %s29, 0
      %p68 = por %p66, %p67
      %s69 = ssub.s32 %s30, %s42
      %p70 = scmp.eq.s32.totalorder %s69, 0
      %s72 = sadd.s32 %s71, 1
      %s73 = scalar_select %p70, %s71, %s72
      %p76 = pneg %p70
      %p77 = scmp.eq.s32.totalorder %s23, 2
      %p78 = por %p76, %p77
      %p79 = scmp.ne.s32.totalorder %s71, %s74
      %p80 = scmp.eq.s32.totalorder %s23, 0
      %p81 = por %p79, %p80
      %p82 = scmp.ne.s32.totalorder %s71, %s74
      %p83 = scmp.eq.s32.totalorder %s28, 2
      %p84 = por %p82, %p83
      %p85 = scmp.ne.s32.totalorder %s74, %s75
      %p86 = scmp.eq.s32.totalorder %s28, 0
      %p87 = por %p85, %p86
      %p88 = scmp.ne.s32.totalorder %s74, %s75
      %p89 = scmp.eq.s32.totalorder %s29, 2
      %p90 = por %p88, %p89
      %p92 = scmp.ne.s32.totalorder %s75, %s91
      %p93 = scmp.eq.s32.totalorder %s29, 0
      %p94 = por %p92, %p93
      %s95 = ssub.s32 %s30, %s42
      %s96 = ssub.s32 %s31, %s38
      %s97 = sor.u32 %s95, %s96
      %p98 = scmp.eq.s32.totalorder %s97, 0
      %s100 = sadd.s32 %s99, 1
      %s101 = scalar_select %p98, %s99, %s100
      %p104 = pneg %p98
      %p105 = scmp.eq.s32.totalorder %s23, 2
      %p106 = por %p104, %p105
      %p107 = scmp.ne.s32.totalorder %s99, %s102
      %p108 = scmp.eq.s32.totalorder %s23, 0
      %p109 = por %p107, %p108
      %p110 = scmp.ne.s32.totalorder %s99, %s102
      %p111 = scmp.eq.s32.totalorder %s28, 2
      %p112 = por %p110, %p111
      %p113 = scmp.ne.s32.totalorder %s102, %s103
      %p114 = scmp.eq.s32.totalorder %s28, 0
      %p115 = por %p113, %p114
      %p116 = scmp.ne.s32.totalorder %s102, %s103
      %p117 = scmp.eq.s32.totalorder %s29, 2
      %p118 = por %p116, %p117
      %p120 = scmp.ne.s32.totalorder %s103, %s119
      %p121 = scmp.eq.s32.totalorder %s29, 0
      %p122 = por %p120, %p121
      %s123 = ssub.s32 %s30, %s42
      %s124 = ssub.s32 %s31, %s38
      %s125 = sor.u32 %s123, %s124
      %p126 = scmp.eq.s32.totalorder %s125, 0
      %s128 = sadd.s32 %s127, 1
      %s129 = scalar_select %p126, %s127, %s128
      %p132 = pneg %p126
      %p133 = scmp.eq.s32.totalorder %s23, 2
      %p134 = por %p132, %p133
      %p135 = scmp.ne.s32.totalorder %s127, %s130
      %p136 = scmp.eq.s32.totalorder %s23, 0
      %p137 = por %p135, %p136
      %p138 = scmp.ne.s32.totalorder %s127, %s130
      %p139 = scmp.eq.s32.totalorder %s28, 2
      %p140 = por %p138, %p139
      %p141 = scmp.ne.s32.totalorder %s130, %s131
      %p142 = scmp.eq.s32.totalorder %s28, 0
      %p143 = por %p141, %p142
      %p144 = scmp.ne.s32.totalorder %s130, %s131
      %p145 = scmp.eq.s32.totalorder %s29, 2
      %p146 = por %p144, %p145
      %p148 = scmp.ne.s32.totalorder %s131, %s147
      %p149 = scmp.eq.s32.totalorder %s29, 0
      %p150 = por %p148, %p149
      %s151 = ssub.s32 %s30, %s42
      %s152 = ssub.s32 %s31, %s38
      %s153 = sor.u32 %s151, %s152
      %p154 = scmp.eq.s32.totalorder %s153, 0
      %s156 = sadd.s32 %s155, 1
      %s157 = scalar_select %p154, %s155, %s156
      %p160 = pneg %p154
      %p161 = scmp.eq.s32.totalorder %s23, 2
      %p162 = por %p160, %p161
      %p163 = scmp.ne.s32.totalorder %s155, %s158
      %p164 = scmp.eq.s32.totalorder %s23, 0
      %p165 = por %p163, %p164
      %p166 = scmp.ne.s32.totalorder %s155, %s158
      %p167 = scmp.eq.s32.totalorder %s28, 2
      %p168 = por %p166, %p167
      %p169 = scmp.ne.s32.totalorder %s158, %s159
      %p170 = scmp.eq.s32.totalorder %s28, 0
      %p171 = por %p169, %p170
      %p172 = scmp.ne.s32.totalorder %s158, %s159
      %p173 = scmp.eq.s32.totalorder %s29, 2
      %p174 = por %p172, %p173
      %p176 = scmp.ne.s32.totalorder %s159, %s175
      %p177 = scmp.eq.s32.totalorder %s29, 0
      %p178 = por %p176, %p177
      %s179 = ssub.s32 %s30, %s42
      %p180 = scmp.eq.s32.totalorder %s179, 0
      %s182 = sadd.s32 %s181, 1
      %s183 = scalar_select %p180, %s181, %s182
      %p186 = pneg %p180
      %p187 = scmp.eq.s32.totalorder %s23, 2
      %p188 = por %p186, %p187
      %p189 = scmp.ne.s32.totalorder %s181, %s184
      %p190 = scmp.eq.s32.totalorder %s23, 0
      %p191 = por %p189, %p190
      %p192 = scmp.ne.s32.totalorder %s181, %s184
      %p193 = scmp.eq.s32.totalorder %s28, 2
      %p194 = por %p192, %p193
      %p195 = scmp.ne.s32.totalorder %s184, %s185
      %p196 = scmp.eq.s32.totalorder %s28, 0
      %p197 = por %p195, %p196
      %p198 = scmp.ne.s32.totalorder %s184, %s185
      %p199 = scmp.eq.s32.totalorder %s29, 2
      %p200 = por %p198, %p199
      %p202 = scmp.ne.s32.totalorder %s185, %s201
      %p203 = scmp.eq.s32.totalorder %s29, 0
      %p204 = por %p202, %p203
      %p205 = scmp.le.s32.totalorder 1, %s23
      %p206 = scmp.lt.s32.totalorder %s23, 4
      %p207 = pnand %p205, %p206
      %p208 = pneg %p207
      // Predicated region
      $region9: #{tpu_custom_call.1} parent=5 // pred_check
        _
      $region10: #{tpu_custom_call.1} parent=5 // pred_check_branch
        %210 = sbr.rel (%p207) target = $region12
      $region11: #{tpu_custom_call.1} parent=5 // pred_region
        %s211 = ssub.s32 %s23, 1
      $region12: #{tpu_custom_call.1} parent=5 // pred_fallthru
        _
      %p212 = scmp.lt.s32.totalorder %s23, 3
      // Predicated region
      $region13: #{tpu_custom_call.1} parent=5 // pred_check
        %p213 = pneg %p212
      $region14: #{tpu_custom_call.1} parent=5 // pred_check_branch
        %215 = sbr.rel (%p213) target = $region16
      $region15: #{tpu_custom_call.1} parent=5 // pred_region
        // Predicated region
        $region17: #{tpu_custom_call.1} parent=15 // pred_check
          %p216 = pneg %p55
        $region18: #{tpu_custom_call.1} parent=15 // pred_check_branch
          %218 = sbr.rel (%p216) target = $region20
        $region19: #{tpu_custom_call.1} parent=15 // pred_region
          %s219 = sand.u32 %s45, 1
          %s220 = scalar_lea.sflag [#allocation3], %s219
          %s221 = sand.u32 %s45, 1
          %s222 = smul.addr %s221, 8
          %s223 = scalar_lea.vmem [#allocation2], %s222
          %s225 = ssub.s32 128, 128
          %226 = vsyncadd %s220, %s225
          %s227 = smul.addr %s30, 128
          %s228 = scalar_lea.hbm %s0, %s227
          %s230 = sshll.u32 %s223, 4
          %s231 = int_to_ptr.vmem [resolvable:$true] %s230
          %233 = dma.hbm_to_vmem [thread:$0]  %s228, 128, %s231, %s220
        $region20: #{tpu_custom_call.1} parent=15 // pred_fallthru
          _
        // Predicated region
        $region21: #{tpu_custom_call.1} parent=15 // pred_check
          %p234 = pneg %p81
        $region22: #{tpu_custom_call.1} parent=15 // pred_check_branch
          %236 = sbr.rel (%p234) target = $region24
        $region23: #{tpu_custom_call.1} parent=15 // pred_region
          %s237 = sand.u32 %s23, 1
          %s238 = scalar_lea.sflag [#allocation6], %s237
          %s239 = sand.u32 %s71, 1
          %s240 = smul.addr %s239, 8
          %s241 = scalar_lea.vmem [#allocation5], %s240
          %s243 = ssub.s32 128, 128
          %244 = vsyncadd %s238, %s243
          %s245 = smul.addr %s30, 128
          %s246 = scalar_lea.hbm %s1, %s245
          %s248 = sshll.u32 %s241, 4
          %s249 = int_to_ptr.vmem [resolvable:$true] %s248
          %251 = dma.hbm_to_vmem [thread:$0]  %s246, 128, %s249, %s238
        $region24: #{tpu_custom_call.1} parent=15 // pred_fallthru
          _
        // Predicated region
        $region25: #{tpu_custom_call.1} parent=15 // pred_check
          %p252 = pneg %p109
        $region26: #{tpu_custom_call.1} parent=15 // pred_check_branch
          %254 = sbr.rel (%p252) target = $region28
        $region27: #{tpu_custom_call.1} parent=15 // pred_region
          %s255 = sand.u32 %s23, 1
          %s256 = scalar_lea.sflag [#allocation6], %s255
          %s257 = sand.u32 %s99, 1
          %s258 = smul.addr %s257, 8
          %s259 = scalar_lea.vmem [#allocation7], %s258
          %s261 = ssub.s32 128, 128
          %262 = vsyncadd %s256, %s261
          %s263 = sadd.s32 %s31, %s30
          %s264 = smul.addr %s263, 128
          %s265 = scalar_lea.hbm %s2, %s264
          %s267 = sshll.u32 %s259, 4
          %s268 = int_to_ptr.vmem [resolvable:$true] %s267
          %270 = dma.hbm_to_vmem [thread:$0]  %s265, 128, %s268, %s256
        $region28: #{tpu_custom_call.1} parent=15 // pred_fallthru
          _
        // Predicated region
        $region29: #{tpu_custom_call.1} parent=15 // pred_check
          %p271 = pneg %p137
        $region30: #{tpu_custom_call.1} parent=15 // pred_check_branch
          %273 = sbr.rel (%p271) target = $region32
        $region31: #{tpu_custom_call.1} parent=15 // pred_region
          %s274 = sand.u32 %s23, 1
          %s275 = scalar_lea.sflag [#allocation9], %s274
          %s276 = sand.u32 %s127, 1
          %s277 = smul.addr %s276, 8
          %s278 = scalar_lea.vmem [#allocation8], %s277
          %s280 = ssub.s32 128, 128
          %281 = vsyncadd %s275, %s280
          %s282 = sadd.s32 %s31, %s30
          %s283 = smul.addr %s282, 128
          %s284 = scalar_lea.hbm %s3, %s283
          %s286 = sshll.u32 %s278, 4
          %s287 = int_to_ptr.vmem [resolvable:$true] %s286
          %289 = dma.hbm_to_vmem [thread:$0]  %s284, 128, %s287, %s275
        $region32: #{tpu_custom_call.1} parent=15 // pred_fallthru
          _
        // Predicated region
        $region33: #{tpu_custom_call.1} parent=15 // pred_check
          %p290 = pneg %p165
        $region34: #{tpu_custom_call.1} parent=15 // pred_check_branch
          %292 = sbr.rel (%p290) target = $region36
        $region35: #{tpu_custom_call.1} parent=15 // pred_region
          %s293 = sand.u32 %s23, 1
          %s294 = scalar_lea.sflag [#allocation9], %s293
          %s295 = sand.u32 %s155, 1
          %s296 = smul.addr %s295, 8
          %s297 = scalar_lea.vmem [#allocation10], %s296
          %s299 = ssub.s32 128, 128
          %300 = vsyncadd %s294, %s299
          %s301 = sadd.s32 %s31, %s30
          %s302 = smul.addr %s301, 128
          %s303 = scalar_lea.hbm %s4, %s302
          %s305 = sshll.u32 %s297, 4
          %s306 = int_to_ptr.vmem [resolvable:$true] %s305
          %308 = dma.hbm_to_vmem [thread:$0]  %s303, 128, %s306, %s294
        $region36: #{tpu_custom_call.1} parent=15 // pred_fallthru
          _
      $region16: #{tpu_custom_call.1} parent=5 // pred_fallthru
        _
      %p309 = scmp.le.s32.totalorder 1, %s23
      %p310 = scmp.lt.s32.totalorder %s23, 4
      %p311 = pnand %p309, %p310
      %p312 = pneg %p311
      // Predicated region
      $region37: #{tpu_custom_call.1} parent=5 // pred_check
        _
      $region38: #{tpu_custom_call.1} parent=5 // pred_check_branch
        %314 = sbr.rel (%p311) target = $region40
      $region39: #{tpu_custom_call.1} parent=5 // pred_region
        %s315 = ssub.s32 %s23, 1
        %s316 = sand.u32 %s48, 1
        %s317 = scalar_lea.sflag [#allocation3], %s316
        %s318 = sand.u32 %s48, 1
        %s319 = smul.addr %s318, 8
        %s320 = scalar_lea.vmem [#allocation2], %s319
        // Predicated region
        $region41: #{tpu_custom_call.1} parent=39 // pred_check
          %p321 = pneg %p61
        $region42: #{tpu_custom_call.1} parent=39 // pred_check_branch
          %323 = sbr.rel (%p321) target = $region44
        $region43: #{tpu_custom_call.1} parent=39 // pred_region
          %324 = dma.done %s317, 128
        $region44: #{tpu_custom_call.1} parent=39 // pred_fallthru
          _
        %s325 = sand.u32 %s28, 1
        %s326 = scalar_lea.sflag [#allocation6], %s325
        %s327 = sand.u32 %s74, 1
        %s328 = smul.addr %s327, 8
        %s329 = scalar_lea.vmem [#allocation5], %s328
        // Predicated region
        $region45: #{tpu_custom_call.1} parent=39 // pred_check
          %p330 = pneg %p87
        $region46: #{tpu_custom_call.1} parent=39 // pred_check_branch
          %332 = sbr.rel (%p330) target = $region48
        $region47: #{tpu_custom_call.1} parent=39 // pred_region
          %333 = dma.done %s326, 128
        $region48: #{tpu_custom_call.1} parent=39 // pred_fallthru
          _
        %s334 = sand.u32 %s28, 1
        %s335 = scalar_lea.sflag [#allocation6], %s334
        %s336 = sand.u32 %s102, 1
        %s337 = smul.addr %s336, 8
        %s338 = scalar_lea.vmem [#allocation7], %s337
        // Predicated region
        $region49: #{tpu_custom_call.1} parent=39 // pred_check
          %p339 = pneg %p115
        $region50: #{tpu_custom_call.1} parent=39 // pred_check_branch
          %341 = sbr.rel (%p339) target = $region52
        $region51: #{tpu_custom_call.1} parent=39 // pred_region
          %342 = dma.done %s335, 128
        $region52: #{tpu_custom_call.1} parent=39 // pred_fallthru
          _
        %s343 = sand.u32 %s28, 1
        %s344 = scalar_lea.sflag [#allocation9], %s343
        %s345 = sand.u32 %s130, 1
        %s346 = smul.addr %s345, 8
        %s347 = scalar_lea.vmem [#allocation8], %s346
        // Predicated region
        $region53: #{tpu_custom_call.1} parent=39 // pred_check
          %p348 = pneg %p143
        $region54: #{tpu_custom_call.1} parent=39 // pred_check_branch
          %350 = sbr.rel (%p348) target = $region56
        $region55: #{tpu_custom_call.1} parent=39 // pred_region
          %351 = dma.done %s344, 128
        $region56: #{tpu_custom_call.1} parent=39 // pred_fallthru
          _
        %s352 = sand.u32 %s28, 1
        %s353 = scalar_lea.sflag [#allocation9], %s352
        %s354 = sand.u32 %s158, 1
        %s355 = smul.addr %s354, 8
        %s356 = scalar_lea.vmem [#allocation10], %s355
        // Predicated region
        $region57: #{tpu_custom_call.1} parent=39 // pred_check
          %p357 = pneg %p171
        $region58: #{tpu_custom_call.1} parent=39 // pred_check_branch
          %359 = sbr.rel (%p357) target = $region60
        $region59: #{tpu_custom_call.1} parent=39 // pred_region
          %360 = dma.done %s353, 128
        $region60: #{tpu_custom_call.1} parent=39 // pred_fallthru
          _
        %s361 = sand.u32 %s48, 1
        %s362 = scalar_lea.sflag [#allocation3], %s361
        %s363 = sand.u32 %s48, 1
        %s364 = smul.addr %s363, 8
        %s365 = scalar_lea.vmem [#allocation2], %s364
        %p366 = pneg %p61
        %p367 = pneg %p58
        %s368 = sand.u32 %s28, 1
        %s369 = scalar_lea.sflag [#allocation6], %s368
        %s370 = sand.u32 %s74, 1
        %s371 = smul.addr %s370, 8
        %s372 = scalar_lea.vmem [#allocation5], %s371
        %p373 = pneg %p87
        %p374 = pneg %p84
        %s375 = sand.u32 %s28, 1
        %s376 = scalar_lea.sflag [#allocation6], %s375
        %s377 = sand.u32 %s102, 1
        %s378 = smul.addr %s377, 8
        %s379 = scalar_lea.vmem [#allocation7], %s378
        %p380 = pneg %p115
        %p381 = pneg %p112
        %s382 = sand.u32 %s28, 1
        %s383 = scalar_lea.sflag [#allocation9], %s382
        %s384 = sand.u32 %s130, 1
        %s385 = smul.addr %s384, 8
        %s386 = scalar_lea.vmem [#allocation8], %s385
        %p387 = pneg %p143
        %p388 = pneg %p140
        %s389 = sand.u32 %s28, 1
        %s390 = scalar_lea.sflag [#allocation9], %s389
        %s391 = sand.u32 %s158, 1
        %s392 = smul.addr %s391, 8
        %s393 = scalar_lea.vmem [#allocation10], %s392
        %p394 = pneg %p171
        %p395 = pneg %p168
        %p396 = pneg %p197
        %p397 = pneg %p194
        %s398 = sand.u32 %s184, 1
        %s399 = scalar_lea.sflag [#allocation4], %s398
        %s400 = sand.u32 %s184, 1
        %s401 = smul.addr %s400, 8
        %s402 = scalar_lea.vmem [#allocation11], %s401
        %v403 = vlaneseq
        %v404 = vand.u32 %v403, 127
        %p405 = scmp.eq.s32.totalorder %s33, 0
        // Predicated region
        $region61: #{tpu_custom_call.1} parent=39 // pred_check
          %p406 = pneg %p405
        $region62: #{tpu_custom_call.1} parent=39 // pred_check_branch
          %408 = sbr.rel (%p406) target = $region64
        $region63: #{tpu_custom_call.1} parent=39 // pred_region
          %v409 = vld [vmem:[%s320] sm:$0xff]
          %v410 = vld [vmem:[%s329] sm:$0xff]
          %v411 = vmax.f32 %v409, 0.0
          %v412 = vand.u32 2147483647, %v409
          %v413 = vsub.f32 0.0, %v412
          %v414 = vmul.f32 %v413, 1.442695
          %v415 = vpow.pop %v414
          %v416 = vadd.f32 %v415, 1.0
          %v417 = vlog2.pop %v416
          %v418 = vmul.f32 %v417, 0.6931472
          %v419 = vadd.f32 %v411, %v418
          %v420 = vmul.f32 %v410, %v419
          %421 = vadd.xlane.f32.xlu0 %v420
          %v422 = vpop.xlane.xlu0 %421
          %v423 = vrot.slane %v422, 4
          %v424 = vadd.f32 %v422, %v423
          %v425 = vrot.slane %v424, 2
          %v426 = vadd.f32 %v424, %v425
          %v427 = vrot.slane %v426, 1
          %v428 = vadd.f32 %v426, %v427
          %429 = vadd.xlane.f32.xlu0 %v410
          %v430 = vpop.xlane.xlu0 %429
          %v431 = vrot.slane %v430, 4
          %v432 = vadd.f32 %v430, %v431
          %v433 = vrot.slane %v432, 2
          %v434 = vadd.f32 %v432, %v433
          %v435 = vrot.slane %v434, 1
          %v436 = vadd.f32 %v434, %v435
          %vm437 = vcmp.eq.s32.totalorder %v404, 0
          %v438 = vsel %vm437, 1, 0
          %v439 = vcvt.s32.f32 %v438
          %v440 = vmul.f32 %v428, %v439
          %vm441 = vcmp.eq.s32.totalorder %v404, 1
          %v442 = vsel %vm441, 1, 0
          %v443 = vcvt.s32.f32 %v442
          %v444 = vmul.f32 %v436, %v443
          %v445 = vadd.f32 %v440, %v444
          %446 = vst [vmem:[%s402] sm:$0xff] %v445
        $region64: #{tpu_custom_call.1} parent=39 // pred_fallthru
          _
        %v447 = vld [vmem:[%s338] sm:$0xff]
        %v448 = vld [vmem:[%s347] sm:$0xff]
        %vm449 = vcmp.lt.s32.totalorder %v404, 16
        %v450 = vsel %vm449, 1, 0
        %v451 = vcvt.s32.f32 %v450
        %s452 = smul.u32 %s33, 8
        %v453 = vlaneseq
        %v454 = vshrl.u32 %v453, 7
        %v455 = vstv %s452
        %v456 = vadd.s32 %v455, %v454
        %vm457 = vcmp.lt.s32.totalorder %v456, 5
        %v458 = vsel %vm457, 1, 0
        %v459 = vcvt.s32.f32 %v458
        %v460 = vand.u32 2147483647, %v447
        %v461 = vsub.f32 0.0, %v460
        %v462 = vmul.f32 %v461, 1.442695
        %v463 = vpow.pop %v462
        %v464 = vadd.f32 %v463, 1.0
        %v465 = vlog2.pop %v464
        %v466 = vmul.f32 %v465, 0.6931472
        %v467 = vmax.f32 %v447, 0.0
        %v468 = vmul.f32 %v447, %v448
        %v469 = vsub.f32 %v467, %v468
        %v470 = vadd.f32 %v469, %v466
        %v471 = vmul.f32 %v470, %v451
        %472 = vadd.xlane.f32.xlu0 %v471
        %v473 = vpop.xlane.xlu0 %472
        %v474 = vmul.f32 %v473, 0.0625
        %v475 = vmul.f32 %v474, %v459
        %v476 = vrot.slane %v475, 4
        %v477 = vadd.f32 %v475, %v476
        %v478 = vrot.slane %v477, 2
        %v479 = vadd.f32 %v477, %v478
        %v480 = vrot.slane %v479, 1
        %v481 = vadd.f32 %v479, %v480
        %v482 = vrcp.pop %v464
        %vm483 = vcmp.ge.f32.partialorder %v447, 0.0
        %v484 = vmul.f32 %v463, %v482
        %v485 = vsel %vm483, %v482, %v484
        %v486 = vmul.f32 %v485, %v451
        %v487 = vmul.f32 %v448, %v451
        %v488 = vmul.f32 %v486, %v487
        %489 = vadd.xlane.f32.xlu0 %v488
        %v490 = vpop.xlane.xlu0 %489
        %491 = vadd.xlane.f32.xlu0 %v486
        %v492 = vpop.xlane.xlu0 %491
        %493 = vadd.xlane.f32.xlu0 %v487
        %v494 = vpop.xlane.xlu0 %493
        %v495 = vmul.f32 %v490, 2.0
        %v496 = vadd.f32 %v495, 1.0
        %v497 = vadd.f32 %v492, %v494
        %v498 = vadd.f32 %v497, 1.0
        %v499 = vrcp.pop %v498
        %v500 = vmul.f32 %v496, %v499
        %v501 = vsub.f32 1.0, %v500
        %v502 = vmul.f32 %v501, %v459
        %v503 = vrot.slane %v502, 4
        %v504 = vadd.f32 %v502, %v503
        %v505 = vrot.slane %v504, 2
        %v506 = vadd.f32 %v504, %v505
        %v507 = vrot.slane %v506, 1
        %v508 = vadd.f32 %v506, %v507
        %vm509 = vcmp.gt.f32.partialorder %v486, 0.5
        %v510 = vsel %vm509, 1, 0
        %v511 = vcvt.s32.f32 %v510
        %v512 = vmul.f32 %v511, %v487
        %513 = vadd.xlane.f32.xlu0 %v512
        %v514 = vpop.xlane.xlu0 %513
        %515 = vadd.xlane.f32.xlu0 %v511
        %v516 = vpop.xlane.xlu0 %515
        %v517 = vadd.f32 %v516, %v494
        %v518 = vsub.f32 %v517, %v514
        %vm519 = vcmp.gt.f32.partialorder %v518, 0.0
        %v520 = vrcp.pop %v518
        %v521 = vmul.f32 %v514, %v520
        %v522 = vsel %vm519, %v521, 0.0
        %vm523 = vcmp.gt.f32.partialorder %v522, 0.0
        %v524 = vsel %vm523, 1, 0
        %v525 = vcvt.s32.f32 %v524
        %v526 = vmul.f32 %v525, %v459
        %v527 = vrot.slane %v526, 4
        %v528 = vadd.f32 %v526, %v527
        %v529 = vrot.slane %v528, 2
        %v530 = vadd.f32 %v528, %v529
        %v531 = vrot.slane %v530, 1
        %v532 = vadd.f32 %v530, %v531
        %v533 = vld [vmem:[%s356] sm:$0xff]
        %v534 = vsub.f32 %v533, %v522
        %v535 = vand.u32 2147483647, %v534
        %v536 = vmul.f32 %v535, %v526
        %vm537 = vcmask 7168
        %v538 = vsel %vm537, %v536, 0.0
        %v539 = vrot.slane %v538, 4
        %v540 = vadd.f32 %v538, %v539
        %v541 = vrot.slane %v540, 2
        %v542 = vadd.f32 %v540, %v541
        %v543 = vrot.slane %v542, 1
        %v544 = vadd.f32 %v542, %v543
        %v545 = vld [vmem:[%s402] sm:$0xff]
        %vm546 = vcmp.eq.s32.totalorder %v404, 2
        %v547 = vsel %vm546, 1, 0
        %v548 = vcvt.s32.f32 %v547
        %v549 = vmul.f32 %v481, %v548
        %vm550 = vcmp.eq.s32.totalorder %v404, 3
        %v551 = vsel %vm550, 1, 0
        %v552 = vcvt.s32.f32 %v551
        %v553 = vmul.f32 %v508, %v552
        %v554 = vadd.f32 %v549, %v553
        %vm555 = vcmp.eq.s32.totalorder %v404, 4
        %v556 = vsel %vm555, 1, 0
        %v557 = vcvt.s32.f32 %v556
        %559 = vset.pattern.permute.xlu0 0
        %560 = vperm.xlu0 %559, %v544
        %v561 = vpop.permute.xlu0 %560
        %v563 = vmul.f32 %v561, %v557
        %v564 = vadd.f32 %v554, %v563
        %vm565 = vcmp.eq.s32.totalorder %v404, 5
        %v566 = vsel %vm565, 1, 0
        %v567 = vcvt.s32.f32 %v566
        %v568 = vmul.f32 %v532, %v567
        %v569 = vadd.f32 %v564, %v568
        %v570 = vadd.f32 %v545, %v569
        %571 = vst [vmem:[%s402] sm:$0xff] %v570
        %s572 = sand.u32 %s184, 1
        %s573 = scalar_lea.sflag [#allocation4], %s572
        %s574 = sand.u32 %s184, 1
        %s575 = smul.addr %s574, 8
        %s576 = scalar_lea.vmem [#allocation11], %s575
        // Predicated region
        $region65: #{tpu_custom_call.1} parent=39 // pred_check
          %p577 = pneg %p194
        $region66: #{tpu_custom_call.1} parent=39 // pred_check_branch
          %579 = sbr.rel (%p577) target = $region68
        $region67: #{tpu_custom_call.1} parent=39 // pred_region
          %s581 = ssub.s32 128, 128
          %582 = vsyncadd %s573, %s581
          %s583 = smul.addr %s32, 128
          %s584 = scalar_lea.hbm %s5, %s583
          %s586 = sshll.u32 %s576, 4
          %s587 = int_to_ptr.vmem [resolvable:$true] %s586
          %589 = dma.vmem_to_hbm [thread:$0]  %s587, 128, %s584, %s573
        $region68: #{tpu_custom_call.1} parent=39 // pred_fallthru
          _
      $region40: #{tpu_custom_call.1} parent=5 // pred_fallthru
        _
      %p590 = scmp.le.s32.totalorder 2, %s23
      // Predicated region
      $region69: #{tpu_custom_call.1} parent=5 // pred_check
        %p591 = pneg %p590
      $region70: #{tpu_custom_call.1} parent=5 // pred_check_branch
        %593 = sbr.rel (%p591) target = $region72
      $region71: #{tpu_custom_call.1} parent=5 // pred_region
        %s594 = ssub.s32 %s23, 2
        // Predicated region
        $region73: #{tpu_custom_call.1} parent=71 // pred_check
          %p595 = pneg %p200
        $region74: #{tpu_custom_call.1} parent=71 // pred_check_branch
          %597 = sbr.rel (%p595) target = $region76
        $region75: #{tpu_custom_call.1} parent=71 // pred_region
          %s598 = sand.u32 %s185, 1
          %s599 = scalar_lea.sflag [#allocation4], %s598
          %s600 = sand.u32 %s185, 1
          %s601 = smul.addr %s600, 8
          %s602 = scalar_lea.vmem [#allocation11], %s601
          %603 = dma.done %s599, 128
        $region76: #{tpu_custom_call.1} parent=71 // pred_fallthru
          _
      $region72: #{tpu_custom_call.1} parent=5 // pred_fallthru
        _
    $region6: #{tpu_custom_call.1} parent=1 // loop_footer
      %s27 = sadd.s32 1, %s23
    $region7: #{tpu_custom_call.1} parent=1 // loop_footer_branch
      %22 = sbr.rel target = $region3
    $region8: #{tpu_custom_call.1} parent=1 // loop_exit
      _
    %604 = vsyncpa [#allocation3], 1
    %s605 = scalar_lea.sflag [#allocation3], 1
    %606 = vsyncpa %s605, 1
    %607 = vsyncpa [#allocation6], 1
    %s608 = scalar_lea.sflag [#allocation6], 1
    %609 = vsyncpa %s608, 1
    %610 = vsyncpa [#allocation9], 1
    %s611 = scalar_lea.sflag [#allocation9], 1
    %612 = vsyncpa %s611, 1
    %613 = vsyncpa [#allocation4], 1
    %s614 = scalar_lea.sflag [#allocation4], 1
    %615 = vsyncpa %s614, 1

</llo_original>
